<compile_context>
chip_gen: v5e
topology: v5e:2x2
jax: 0.10.0
libtpu: 0.0.40
codegen_flags: <defaults>
</compile_context>

<pallas_src>
import functools

import jax
import jax.numpy as jnp
from jax.experimental import pallas as pl
from jax.experimental.pallas import tpu as pltpu


def _dice_kernel(logits_ref, target_ref, g_ref, *, num_classes, tile, valid_hw,
                 needs_mask):
    t = pl.program_id(1)

    # Reset the per-batch Gram accumulator at the first spatial tile.
    @pl.when(t == 0)
    def _():
        g_ref[...] = jnp.zeros_like(g_ref)

    # Cast AFTER the DMA so HBM traffic stays in the input's native dtype.
    x = logits_ref[0].astype(jnp.float32)        # (C, tile)
    tgt = target_ref[0].astype(jnp.int32)        # (1, tile)

    if needs_mask:
        # The last block is partial (no wrapper-side pad): its out-of-bounds
        # lanes hold garbage.  Sanitize x before exp (garbage could be NaN/Inf)
        # and push the target to an out-of-range class so its one-hot row is 0,
        # which zeroes every contribution of those lanes to G.
        pos = t * tile + jax.lax.broadcasted_iota(jnp.int32, (1, tile), 1)
        lane_valid = pos < valid_hw
        x = jnp.where(lane_valid, x, 0.0)
        tgt = jnp.where(lane_valid, tgt, num_classes)

    # Numerically stable softmax over the channel axis; divide -> EUP.
    m = jnp.max(x, axis=0, keepdims=True)                    # (1, tile)
    e = jnp.exp(x - m)                                       # (C, tile)
    inv = pl.reciprocal(jnp.sum(e, axis=0, keepdims=True))   # (1, tile)

    # Fused scaled one-hot: onehot_scaled[c, p] = 1/denom[p] if tgt[p]==c else 0.
    # `probs` is never materialized; the scale rides into the MXU contraction.
    ch = jax.lax.broadcasted_iota(jnp.int32, x.shape, 0)     # (C, tile)
    onehot_scaled = jnp.where(ch == tgt, inv, 0.0)           # (C, tile)

    # Single MXU contraction over the spatial axis:
    #   G[i, j] = sum_p probs[i, p] * onehot[j, p]
    # diag(G) = intersection, row-sums(G) = sum(probs), col-sums(G) = counts.
    g_ref[0] += jax.lax.dot_general(
        e, onehot_scaled,
        dimension_numbers=(((1,), (1,)), ((), ())),
        preferred_element_type=jnp.float32,
        precision=jax.lax.Precision.HIGHEST)


_MAX_TILE = 128 * 1024   # lanes (spatial elements per tile)


def _vmem_budget():
    """Returns (blocks+temps tile budget, explicit scoped-VMEM limit) in bytes."""
    try:
        cap = pltpu.get_tpu_info().vmem_capacity_bytes
    except Exception:
        cap = 64 * 1024 * 1024
    if cap >= 96 * 1024 * 1024:                       # v5e / v6e: 128 MiB VMEM
        return 56 * 1024 * 1024, 96 * 1024 * 1024
    return 40 * 1024 * 1024, 56 * 1024 * 1024         # v7x: 64 MiB VMEM


def _pick_tile(hw, c, logit_bytes, tgt_bytes, budget):
    """Largest multiple-of-128 spatial tile that fits the VMEM budget."""
    if hw < 128:
        return hw                      # single full-extent block (== array dim)
    pack = max(1, 4 // logit_bytes)                    # rows per 32-bit sublane
    c_in = ((c + 8 * pack - 1) // (8 * pack)) * (8 * pack)   # input C padding
    c_f32 = ((c + 7) // 8) * 8                         # f32 temporaries C pad
    # 2x double-buffered input blocks (native dtype; target occupies >=8
    # sublanes) + ~5 f32 (C, tile) in-kernel temporaries (x, e, iota, onehot,
    # masks/intermediates).
    per_lane = 2 * (c_in * logit_bytes + 8 * tgt_bytes) + 5 * c_f32 * 4
    tile = (budget // per_lane) // 128 * 128
    tile = min(tile, _MAX_TILE, (hw // 128) * 128)
    return max(tile, 128)


def dice_loss(logits, target, smooth=1e-5):
    """Pallas implementation of DiceLoss.forward.

    logits: (B, C, H, W) float (any float dtype; bf16 stays bf16 over HBM)
    target: (B, H, W) integer class indices in [0, C)
    returns scalar loss = 1 - mean_{b,c} dice(b, c)
    """
    B, C, H, W = logits.shape
    HW = H * W
    x = logits.reshape(B, C, HW)                 # native dtype, no upcast
    if target.dtype.itemsize > 4:                # e.g. int64 (PyTorch default)
        target = target.astype(jnp.int32)        # no 64-bit TPU vector path
    tgt = target.reshape(B, 1, HW)

    budget, vmem_limit = _vmem_budget()
    tile = _pick_tile(HW, C, x.dtype.itemsize, tgt.dtype.itemsize, budget)
    num_t = pl.cdiv(HW, tile)
    needs_mask = (num_t * tile) != HW            # partial last block -> in-kernel mask

    g = pl.pallas_call(
        functools.partial(_dice_kernel, num_classes=C, tile=tile, valid_hw=HW,
                          needs_mask=needs_mask),
        out_shape=jax.ShapeDtypeStruct((B, C, C), jnp.float32),
        grid_spec=pltpu.PrefetchScalarGridSpec(
            num_scalar_prefetch=0,
            grid=(B, num_t),                      # reduction axis (spatial) last
            in_specs=[
                pl.BlockSpec((1, C, tile), lambda b, t: (b, 0, t)),
                pl.BlockSpec((1, 1, tile), lambda b, t: (b, 0, t)),
            ],
            # Per-batch Gram-matrix output block, resident in VMEM across the
            # spatial axis -> batch axis is safe to shard across TensorCores.
            out_specs=pl.BlockSpec((1, C, C), lambda b, t: (b, 0, 0)),
        ),
        compiler_params=pltpu.CompilerParams(
            dimension_semantics=("parallel", "arbitrary"),
            vmem_limit_bytes=vmem_limit),
    )(x, tgt)

    # Note: an optional v7x-only 2-way spatial split across TensorCores (for
    # B == 1) was considered but left disabled to keep single-TC paths lean.

    # Tiny JAX epilogue on the (B, C, C) Gram matrices.
    inter = jnp.diagonal(g, axis1=1, axis2=2)            # (B, C)
    union = jnp.sum(g, axis=2) + jnp.sum(g, axis=1)      # sum(probs) + counts
    dice = (2.0 * inter + smooth) / (union + smooth)
    return 1.0 - jnp.mean(dice)


def _dice_loss_ref(logits, target, smooth=1e-5):
    """Pure-JAX reference mirroring the PyTorch module, for verification."""
    C = logits.shape[1]
    probs = jax.nn.softmax(logits.astype(jnp.float32), axis=1)
    onehot = jax.nn.one_hot(target, C, axis=1, dtype=jnp.float32)
    inter = jnp.sum(probs * onehot, axis=(2, 3))
    union = jnp.sum(probs, axis=(2, 3)) + jnp.sum(onehot, axis=(2, 3))
    dice = (2.0 * inter + smooth) / (union + smooth)
    return 1.0 - jnp.mean(dice)


if __name__ == "__main__":
    key = jax.random.PRNGKey(0)
    k1, k2, k3, k4 = jax.random.split(key, 4)

    # Main check: f32, spatial size a multiple of 128 (aligned, unmasked path).
    B, C, H, W = 2, 4, 16, 16
    logits = jax.random.normal(k1, (B, C, H, W), dtype=jnp.float32)
    target = jax.random.randint(k2, (B, H, W), 0, C, dtype=jnp.int32)

    loss = jax.block_until_ready(dice_loss(logits, target))
    ref = _dice_loss_ref(logits, target)
    assert jnp.allclose(loss, ref, atol=2e-5, rtol=2e-5), (loss, ref)

    # Ragged check: bf16 logits (native-dtype DMA) + non-128-divisible H*W
    # exercises the pad-free partial last block + in-kernel masking path.
    B2, C2, H2, W2 = 2, 4, 10, 13
    logits2 = jax.random.normal(k3, (B2, C2, H2, W2), dtype=jnp.bfloat16)
    target2 = jax.random.randint(k4, (B2, H2, W2), 0, C2, dtype=jnp.int32)

    loss2 = jax.block_until_ready(dice_loss(logits2, target2))
    ref2 = _dice_loss_ref(logits2, target2)
    assert jnp.allclose(loss2, ref2, atol=2e-5, rtol=2e-5), (loss2, ref2)

    print("KERNEL_OK")
</pallas_src>

<mosaic_0001>
module attributes {stable_mosaic.version = 11 : i64} {
  func.func @_dice_kernel(%arg0: i32, %arg1: i32, %arg2: memref<1x4x256xf32, #tpu.memory_space<vmem>>, %arg3: memref<1x1x256xi32, #tpu.memory_space<vmem>>, %arg4: memref<1x4x4xf32, #tpu.memory_space<vmem>>) attributes {dimension_semantics = [#tpu.dimension_semantics<parallel>, #tpu.dimension_semantics<arbitrary>], iteration_bounds = array<i64: 2, 1>, scalar_prefetch = 0 : i64, scratch_operands = 0 : i64, tpu.core_type = #tpu.core_type<tc>, window_params = [{transform_indices = @transform_0, window_bounds = array<i64: 1, 4, 256>}, {transform_indices = @transform_1, window_bounds = array<i64: 1, 1, 256>}, {transform_indices = @transform_2, window_bounds = array<i64: 1, 4, 4>}]} {
    %c0_i32 = arith.constant 0 : i32
    %0 = arith.cmpi eq, %arg1, %c0_i32 : i32
    %1 = arith.extui %0 : i1 to i32
    %c0_i32_0 = arith.constant 0 : i32
    %2 = arith.cmpi ne, %1, %c0_i32_0 : i32
    scf.if %2 {
      %cst_15 = arith.constant 0.000000e+00 : f32
      %29 = vector.broadcast %cst_15 : f32 to vector<1x4x4xf32>
      %c0_16 = arith.constant 0 : index
      %c0_17 = arith.constant 0 : index
      %c0_18 = arith.constant 0 : index
      %30 = vector.load %arg4[%c0_16, %c0_17, %c0_18] : memref<1x4x4xf32, #tpu.memory_space<vmem>>, vector<1x4x4xf32>
      tpu.vector_store %arg4[%c0_16, %c0_17, %c0_18], %29 {strides = array<i32>} : memref<1x4x4xf32, #tpu.memory_space<vmem>>, vector<1x4x4xf32>,
    } else {
    }
    %c0 = arith.constant 0 : index
    %c0_1 = arith.constant 0 : index
    %c0_2 = arith.constant 0 : index
    %3 = vector.load %arg2[%c0, %c0_1, %c0_2] : memref<1x4x256xf32, #tpu.memory_space<vmem>>, vector<1x4x256xf32>
    %4 = vector.shape_cast %3 : vector<1x4x256xf32> to vector<4x256xf32>
    %c0_3 = arith.constant 0 : index
    %c0_4 = arith.constant 0 : index
    %c0_5 = arith.constant 0 : index
    %5 = vector.load %arg3[%c0_3, %c0_4, %c0_5] : memref<1x1x256xi32, #tpu.memory_space<vmem>>, vector<1x1x256xi32>
    %6 = vector.shape_cast %5 : vector<1x1x256xi32> to vector<1x256xi32>
    %cst = arith.constant dense<0xFF800000> : vector<256xf32>
    %7 = vector.multi_reduction <maximumf>, %4, %cst [0] : vector<4x256xf32> to vector<256xf32>
    %8 = vector.shape_cast %7 : vector<256xf32> to vector<1x256xf32>
    %9 = vector.broadcast %8 : vector<1x256xf32> to vector<4x256xf32>
    %10 = arith.subf %4, %9 : vector<4x256xf32>
    %11 = math.exp %10 : vector<4x256xf32>
    %cst_6 = arith.constant dense<0.000000e+00> : vector<256xf32>
    %12 = vector.multi_reduction <add>, %11, %cst_6 [0] : vector<4x256xf32> to vector<256xf32>
    %13 = vector.shape_cast %12 : vector<256xf32> to vector<1x256xf32>
    %14 = tpu.reciprocal %13 : vector<1x256xf32> -> vector<1x256xf32>
    %15 = tpu.iota {dimensions = array<i32: 0>} : vector<4x256xi32>
    %16 = vector.broadcast %6 : vector<1x256xi32> to vector<4x256xi32>
    %17 = arith.cmpi eq, %15, %16 : vector<4x256xi32>
    %cst_7 = arith.constant 0.000000e+00 : f32
    %18 = vector.shape_cast %14 : vector<1x256xf32> to vector<1x256xf32>
    %19 = vector.broadcast %18 : vector<1x256xf32> to vector<4x256xf32>
    %20 = vector.broadcast %cst_7 : f32 to vector<4x256xf32>
    %21 = arith.select %17, %19, %20 : vector<4x256xi1>, vector<4x256xf32>
    %c0_8 = arith.constant 0 : index
    %c0_9 = arith.constant 0 : index
    %c0_10 = arith.constant 0 : index
    %22 = vector.load %arg4[%c0_8, %c0_9, %c0_10] : memref<1x4x4xf32, #tpu.memory_space<vmem>>, vector<1x4x4xf32>
    %23 = vector.shape_cast %22 : vector<1x4x4xf32> to vector<4x4xf32>
    %cst_11 = arith.constant dense<0.000000e+00> : vector<4x4xf32>
    %24 = tpu.matmul %11, %21, %cst_11 {dimension_numbers = #tpu.dot_dimension_numbers<[1], [1], [0], [0], [0, 0, 1, 0], [], []>, precision = #tpu.contract_precision<fp32>} : vector<4x256xf32>, vector<4x256xf32>, vector<4x4xf32> -> vector<4x4xf32>
    %25 = arith.addf %23, %24 : vector<4x4xf32>
    %c0_12 = arith.constant 0 : index
    %c0_13 = arith.constant 0 : index
    %c0_14 = arith.constant 0 : index
    %26 = vector.load %arg4[%c0_12, %c0_13, %c0_14] : memref<1x4x4xf32, #tpu.memory_space<vmem>>, vector<1x4x4xf32>
    %27 = vector.shape_cast %26 : vector<1x4x4xf32> to vector<4x4xf32>
    %28 = vector.shape_cast %25 : vector<4x4xf32> to vector<1x4x4xf32>
    tpu.vector_store %arg4[%c0_12, %c0_13, %c0_14], %28 {strides = array<i32>} : memref<1x4x4xf32, #tpu.memory_space<vmem>>, vector<1x4x4xf32>,
    return
  }
  func.func @transform_0(%arg0: i32, %arg1: i32) -> (i32, i32, i32) {
    %c0_i32 = arith.constant 0 : i32
    %c0_i32_0 = arith.constant 0 : i32
    return %arg0, %c0_i32, %arg1 : i32, i32, i32
  }
  func.func @transform_1(%arg0: i32, %arg1: i32) -> (i32, i32, i32) {
    %c0_i32 = arith.constant 0 : i32
    %c0_i32_0 = arith.constant 0 : i32
    return %arg0, %c0_i32, %arg1 : i32, i32, i32
  }
  func.func @transform_2(%arg0: i32, %arg1: i32) -> (i32, i32, i32) {
    %c0_i32 = arith.constant 0 : i32
    %c0_i32_0 = arith.constant 0 : i32
    %c0_i32_1 = arith.constant 0 : i32
    return %arg0, %c0_i32, %c0_i32_0 : i32, i32, i32
  }
}

</mosaic_0001>

<llo_original>
// kernel: tpu_custom_call.1
$region0: #{tpu_custom_call.1}
  #allocation0 [shape = 'u32[]', space=smem, size = 0x4, offset = 0x4, fixed_abs, tag = 'smem constant byte address 0x4 - core index']
  #allocation1 [shape = 'u32[72,128]{1,0:T(1,128)}', space=vmem, size = 0x9000, scoped, tag = 'internal scratch']
  %s0 = inlined_call_operand.hbm [shape: f32[2,4,256], index: 0, kind: input, shape index: {}]
  %s1 = inlined_call_operand.hbm [shape: s32[2,1,256], index: 1, kind: input, shape index: {}]
  %s2 = inlined_call_operand.hbm [shape: f32[2,4,4], index: 2, kind: output, shape index: {}]
  %s3 = sld [smem:[#allocation0]]
  $region53: #{tpu_custom_call.1} parent=0
    _
  %s5 = ssub.s32 1, %s3
  %s6 = scalar_select 0, %s5, %s3
  $region1: #{tpu_custom_call.1} parent=0
    #allocation2 [shape = 'u8[8192]{0}', space=vmem, size = 0x2000, scoped, tag = 'input window, operand 0']
    #allocation3 [shape = 's32[2]{0}', space=sflag, size = 0x8, scoped, tag = 'scoped memory for tpu_custom_call.1']
    #allocation4 [shape = 's32[2]{0}', space=sflag, size = 0x8, scoped, tag = 'scoped memory for tpu_custom_call.1']
    #allocation5 [shape = 'u8[2048]{0}', space=vmem, size = 0x800, scoped, tag = 'input window, operand 1']
    #allocation6 [shape = 's32[2]{0}', space=sflag, size = 0x8, scoped, tag = 'scoped memory for tpu_custom_call.1']
    #allocation7 [shape = 'u8[4096]{0}', space=vmem, size = 0x1000, scoped, tag = 'output window, operand 0']
    %7 = vsyncpa [#allocation3], 0
    %s8 = scalar_lea.sflag [#allocation3], 1
    %9 = vsyncpa %s8, 0
    %10 = vsyncpa [#allocation6], 0
    %s11 = scalar_lea.sflag [#allocation6], 1
    %12 = vsyncpa %s11, 0
    %13 = vsyncpa [#allocation4], 0
    %s14 = scalar_lea.sflag [#allocation4], 1
    %15 = vsyncpa %s14, 0
    loop: start=0, step=1, limit=4
    $region2: #{tpu_custom_call.1} parent=1 // loop_pre_header
      _
    $region3: #{tpu_custom_call.1} parent=1 // loop_header
      %s17 = sphi 0, %s21
      %p18 = scmp.ge.s32.totalorder %s17, 4
      %s24 = sphi 0, %s36
      %s25 = sphi 0, %s32
      %s26 = sphi 0, %s24
      %s27 = sphi 0, %s25
      %s28 = sphi 0, %s26
      %s29 = sphi 0, %s27
      %s41 = sphi 0, %s43
      %s44 = sphi 0, %s41
      %s45 = sphi 0, %s44
      %s61 = sphi 0, %s45
      %s69 = sphi 0, %s71
      %s72 = sphi 0, %s69
      %s73 = sphi 0, %s72
      %s89 = sphi 0, %s73
      %s95 = sphi 0, %s97
      %s98 = sphi 0, %s95
      %s99 = sphi 0, %s98
      %s115 = sphi 0, %s99
    $region4: #{tpu_custom_call.1} parent=1 // loop_header_branch
      %20 = sbr.rel (%p18) target = $region8
    $region5: #{tpu_custom_call.1} parent=1 // loop_body
      %s22 = ssub.s32 %s17, 1
      %s23 = ssub.s32 %s17, 2
      %s30 = sadd.s32 1, %s25
      %p31 = scmp.ge.s32.totalorder %s30, 1
      %s32 = scalar_select %p31, 0, %s30
      %s33 = sadd.s32 1, %s24
      %s34 = scalar_select %p31, %s33, %s24
      %p35 = scmp.ge.s32.totalorder %s34, 2
      %s36 = scalar_select %p35, 0, %s34
      %s37 = ssub.s32 %s24, %s36
      %s38 = ssub.s32 %s25, %s32
      %s39 = sor.u32 %s37, %s38
      %p40 = scmp.eq.s32.totalorder %s39, 0
      %s42 = sadd.s32 %s41, 1
      %s43 = scalar_select %p40, %s41, %s42
      %p46 = pneg %p40
      %p47 = scmp.eq.s32.totalorder %s17, 1
      %p48 = por %p46, %p47
      %p49 = scmp.ne.s32.totalorder %s41, %s44
      %p50 = scmp.eq.s32.totalorder %s17, 0
      %p51 = por %p49, %p50
      %p52 = scmp.ne.s32.totalorder %s41, %s44
      %p53 = scmp.eq.s32.totalorder %s22, 1
      %p54 = por %p52, %p53
      %p55 = scmp.ne.s32.totalorder %s44, %s45
      %p56 = scmp.eq.s32.totalorder %s22, 0
      %p57 = por %p55, %p56
      %p58 = scmp.ne.s32.totalorder %s44, %s45
      %p59 = scmp.eq.s32.totalorder %s23, 1
      %p60 = por %p58, %p59
      %p62 = scmp.ne.s32.totalorder %s45, %s61
      %p63 = scmp.eq.s32.totalorder %s23, 0
      %p64 = por %p62, %p63
      %s65 = ssub.s32 %s24, %s36
      %s66 = ssub.s32 %s25, %s32
      %s67 = sor.u32 %s65, %s66
      %p68 = scmp.eq.s32.totalorder %s67, 0
      %s70 = sadd.s32 %s69, 1
      %s71 = scalar_select %p68, %s69, %s70
      %p74 = pneg %p68
      %p75 = scmp.eq.s32.totalorder %s17, 1
      %p76 = por %p74, %p75
      %p77 = scmp.ne.s32.totalorder %s69, %s72
      %p78 = scmp.eq.s32.totalorder %s17, 0
      %p79 = por %p77, %p78
      %p80 = scmp.ne.s32.totalorder %s69, %s72
      %p81 = scmp.eq.s32.totalorder %s22, 1
      %p82 = por %p80, %p81
      %p83 = scmp.ne.s32.totalorder %s72, %s73
      %p84 = scmp.eq.s32.totalorder %s22, 0
      %p85 = por %p83, %p84
      %p86 = scmp.ne.s32.totalorder %s72, %s73
      %p87 = scmp.eq.s32.totalorder %s23, 1
      %p88 = por %p86, %p87
      %p90 = scmp.ne.s32.totalorder %s73, %s89
      %p91 = scmp.eq.s32.totalorder %s23, 0
      %p92 = por %p90, %p91
      %s93 = ssub.s32 %s24, %s36
      %p94 = scmp.eq.s32.totalorder %s93, 0
      %s96 = sadd.s32 %s95, 1
      %s97 = scalar_select %p94, %s95, %s96
      %p100 = pneg %p94
      %p101 = scmp.eq.s32.totalorder %s17, 1
      %p102 = por %p100, %p101
      %p103 = scmp.ne.s32.totalorder %s95, %s98
      %p104 = scmp.eq.s32.totalorder %s17, 0
      %p105 = por %p103, %p104
      %p106 = scmp.ne.s32.totalorder %s95, %s98
      %p107 = scmp.eq.s32.totalorder %s22, 1
      %p108 = por %p106, %p107
      %p109 = scmp.ne.s32.totalorder %s98, %s99
      %p110 = scmp.eq.s32.totalorder %s22, 0
      %p111 = por %p109, %p110
      %p112 = scmp.ne.s32.totalorder %s98, %s99
      %p113 = scmp.eq.s32.totalorder %s23, 1
      %p114 = por %p112, %p113
      %p116 = scmp.ne.s32.totalorder %s99, %s115
      %p117 = scmp.eq.s32.totalorder %s23, 0
      %p118 = por %p116, %p117
      %p119 = scmp.le.s32.totalorder 1, %s17
      %p120 = scmp.lt.s32.totalorder %s17, 3
      %p121 = pnand %p119, %p120
      %p122 = pneg %p121
      // Predicated region
      $region9: #{tpu_custom_call.1} parent=5 // pred_check
        _
      $region10: #{tpu_custom_call.1} parent=5 // pred_check_branch
        %124 = sbr.rel (%p121) target = $region12
      $region11: #{tpu_custom_call.1} parent=5 // pred_region
        %s125 = ssub.s32 %s17, 1
      $region12: #{tpu_custom_call.1} parent=5 // pred_fallthru
        _
      %p126 = scmp.lt.s32.totalorder %s17, 2
      // Predicated region
      $region13: #{tpu_custom_call.1} parent=5 // pred_check
        %p127 = pneg %p126
      $region14: #{tpu_custom_call.1} parent=5 // pred_check_branch
        %129 = sbr.rel (%p127) target = $region16
      $region15: #{tpu_custom_call.1} parent=5 // pred_region
        // Predicated region
        $region17: #{tpu_custom_call.1} parent=15 // pred_check
          %p130 = pneg %p51
        $region18: #{tpu_custom_call.1} parent=15 // pred_check_branch
          %132 = sbr.rel (%p130) target = $region20
        $region19: #{tpu_custom_call.1} parent=15 // pred_region
          %s133 = sand.u32 %s41, 1
          %s134 = scalar_lea.sflag [#allocation3], %s133
          %s135 = sand.u32 %s41, 1
          %s136 = smul.addr %s135, 8
          %s137 = scalar_lea.vmem [#allocation2], %s136
          %s138 = smul.u32 2, %s25
          %140 = vsyncadd %s134, 0
          %s141 = smul.addr %s24, 2
          %s142 = sadd.s32 %s138, %s141
          %s143 = smul.addr %s142, 4
          %s144 = scalar_lea.hbm %s0, %s143
          %s146 = sshll.u32 %s144, 4
          %s147 = int_to_ptr.hbm [resolvable:$true] %s146
          %s148 = sshll.u32 %s137, 4
          %s149 = int_to_ptr.vmem [resolvable:$true] %s148
          %151 = dma.hbm_to_vmem [thread:$0]  %s147, 128, %s149, %s134
        $region20: #{tpu_custom_call.1} parent=15 // pred_fallthru
          _
        // Predicated region
        $region21: #{tpu_custom_call.1} parent=15 // pred_check
          %p152 = pneg %p79
        $region22: #{tpu_custom_call.1} parent=15 // pred_check_branch
          %154 = sbr.rel (%p152) target = $region24
        $region23: #{tpu_custom_call.1} parent=15 // pred_region
          %s155 = sand.u32 %s69, 1
          %s156 = scalar_lea.sflag [#allocation6], %s155
          %s157 = sand.u32 %s69, 1
          %s158 = smul.addr %s157, 2
          %s159 = scalar_lea.vmem [#allocation5], %s158
          %s160 = smul.u32 2, %s25
          %162 = vsyncadd %s156, 0
          %s163 = smul.addr %s24, 2
          %s164 = sadd.s32 %s160, %s163
          %s165 = scalar_lea.hbm %s1, %s164
          %s167 = sshll.u32 %s165, 4
          %s168 = int_to_ptr.hbm [resolvable:$true] %s167
          %s169 = sshll.u32 %s159, 4
          %s170 = int_to_ptr.vmem [resolvable:$true] %s169
          %172 = dma.hbm_to_vmem [thread:$0]  %s168, 32, %s170, %s156
        $region24: #{tpu_custom_call.1} parent=15 // pred_fallthru
          _
      $region16: #{tpu_custom_call.1} parent=5 // pred_fallthru
        _
      %p173 = scmp.le.s32.totalorder 1, %s17
      %p174 = scmp.lt.s32.totalorder %s17, 3
      %p175 = pnand %p173, %p174
      %p176 = pneg %p175
      // Predicated region
      $region25: #{tpu_custom_call.1} parent=5 // pred_check
        _
      $region26: #{tpu_custom_call.1} parent=5 // pred_check_branch
        %178 = sbr.rel (%p175) target = $region28
      $region27: #{tpu_custom_call.1} parent=5 // pred_region
        %s179 = ssub.s32 %s17, 1
        %s180 = sand.u32 %s44, 1
        %s181 = scalar_lea.sflag [#allocation3], %s180
        %s182 = sand.u32 %s44, 1
        %s183 = smul.addr %s182, 8
        %s184 = scalar_lea.vmem [#allocation2], %s183
        // Predicated region
        $region29: #{tpu_custom_call.1} parent=27 // pred_check
          %p185 = pneg %p57
        $region30: #{tpu_custom_call.1} parent=27 // pred_check_branch
          %187 = sbr.rel (%p185) target = $region32
        $region31: #{tpu_custom_call.1} parent=27 // pred_region
          %189 = dma.done %s181, 128
        $region32: #{tpu_custom_call.1} parent=27 // pred_fallthru
          _
        %s190 = sand.u32 %s72, 1
        %s191 = scalar_lea.sflag [#allocation6], %s190
        %s192 = sand.u32 %s72, 1
        %s193 = smul.addr %s192, 2
        %s194 = scalar_lea.vmem [#allocation5], %s193
        // Predicated region
        $region33: #{tpu_custom_call.1} parent=27 // pred_check
          %p195 = pneg %p85
        $region34: #{tpu_custom_call.1} parent=27 // pred_check_branch
          %197 = sbr.rel (%p195) target = $region36
        $region35: #{tpu_custom_call.1} parent=27 // pred_region
          %199 = dma.done %s191, 32
        $region36: #{tpu_custom_call.1} parent=27 // pred_fallthru
          _
        %s200 = sand.u32 %s44, 1
        %s201 = scalar_lea.sflag [#allocation3], %s200
        %s202 = sand.u32 %s44, 1
        %s203 = smul.addr %s202, 8
        %s204 = scalar_lea.vmem [#allocation2], %s203
        %p205 = pneg %p57
        %p206 = pneg %p54
        %s207 = sand.u32 %s72, 1
        %s208 = scalar_lea.sflag [#allocation6], %s207
        %s209 = sand.u32 %s72, 1
        %s210 = smul.addr %s209, 2
        %s211 = scalar_lea.vmem [#allocation5], %s210
        %p212 = pneg %p85
        %p213 = pneg %p82
        %p214 = pneg %p111
        %p215 = pneg %p108
        %s216 = sand.u32 %s98, 1
        %s217 = scalar_lea.sflag [#allocation4], %s216
        %s218 = sand.u32 %s98, 1
        %s219 = smul.addr %s218, 4
        %s220 = scalar_lea.vmem [#allocation7], %s219
        %s221 = smul.u32 2, %s27
        %s222 = smul.u32 2, %s27
        %p223 = scmp.eq.s32.totalorder %s27, 0
        // Predicated region
        $region37: #{tpu_custom_call.1} parent=27 // pred_check
          %p224 = pneg %p223
        $region38: #{tpu_custom_call.1} parent=27 // pred_check_branch
          %226 = sbr.rel (%p224) target = $region40
        $region39: #{tpu_custom_call.1} parent=27 // pred_region
          %vm227 = vcmask 27648
          %228 = vst.msk [vmem:[%s220] sm:$0xf] %vm227, 0.0
        $region40: #{tpu_custom_call.1} parent=27 // pred_fallthru
          _
        %v229 = vld [vmem:[%s184] sm:$0xff]
        %v230 = vld [vmem:[%s194] sm:$0x3]
        %232 = vst [vmem:[#allocation1] ss:$2 sm:$0xff] %v229
        %v233 = vld.sshfl [vmem:[#allocation1] sm:$0xff pattern:$0x75316420]
        %v234 = vld.sshfl [vmem:[#allocation1 + $0x8] sm:$0xff pattern:$0x75316420]
        %vm237 = vcmask 1043456
        %v238 = vsel %vm237, %v233, -inf
        %v239 = vrot.slane %v238, 4
        %v240 = vmax.f32 %v238, %v239
        %v241 = vrot.slane %v240, 2
        %v242 = vmax.f32 %v240, %v241
        %v243 = vrot.slane %v242, 1
        %v244 = vmax.f32 %v242, %v243
        %v245 = vsel %vm237, %v234, -inf
        %v246 = vrot.slane %v245, 4
        %v247 = vmax.f32 %v245, %v246
        %v248 = vrot.slane %v247, 2
        %v249 = vmax.f32 %v247, %v248
        %v250 = vrot.slane %v249, 1
        %v251 = vmax.f32 %v249, %v250
        %v254 = vrot.slane %v251, 4
        %v255 = vsel %vm237, %v244, %v254
        %v257 = vsub.f32 %v229, %v255
        %v258 = vmul.f32 %v257, 1.442695
        %v259 = vpow.pop %v258
        %261 = vst [vmem:[#allocation1] ss:$2 sm:$0xff] %v259
        %v262 = vld.sshfl [vmem:[#allocation1] sm:$0xff pattern:$0x75316420]
        %v263 = vld.sshfl [vmem:[#allocation1 + $0x8] sm:$0xff pattern:$0x75316420]
        %v266 = vsel %vm237, %v262, 0.0
        %v267 = vrot.slane %v266, 4
        %v268 = vadd.f32 %v266, %v267
        %v269 = vrot.slane %v268, 2
        %v270 = vadd.f32 %v268, %v269
        %v271 = vrot.slane %v270, 1
        %v272 = vadd.f32 %v270, %v271
        %v273 = vsel %vm237, %v263, 0.0
        %v274 = vrot.slane %v273, 4
        %v275 = vadd.f32 %v273, %v274
        %v276 = vrot.slane %v275, 2
        %v277 = vadd.f32 %v275, %v276
        %v278 = vrot.slane %v277, 1
        %v279 = vadd.f32 %v277, %v278
        %v280 = vrcp.pop %v272
        %v281 = vmul.f32 %v272, %v280
        %v282 = vsub.f32 1.0, %v281
        %v283 = vmul.f32 %v280, %v282
        %v284 = vadd.f32 %v280, %v283
        %vm285 = vweird.f32 %v272
        %vm286 = vweird.f32 %v280
        %vm287 = vmor %vm285, %vm286
        %v288 = vsel %vm287, %v280, %v284
        %v289 = vand.u32 2147483647, %v272
        %vm290 = vcmp.eq.f32.partialorder %v289, 8.507059e+37
        %v291 = vand.u32 %v272, 2147483648
        %v292 = vor.u32 1.1754944e-38, %v291
        %v293 = vsel %vm290, %v292, %v288
        %v294 = vrcp.pop %v279
        %v295 = vmul.f32 %v279, %v294
        %v296 = vsub.f32 1.0, %v295
        %v297 = vmul.f32 %v294, %v296
        %v298 = vadd.f32 %v294, %v297
        %vm299 = vweird.f32 %v279
        %vm300 = vweird.f32 %v294
        %vm301 = vmor %vm299, %vm300
        %v302 = vsel %vm301, %v294, %v298
        %v303 = vand.u32 2147483647, %v279
        %vm304 = vcmp.eq.f32.partialorder %v303, 8.507059e+37
        %v305 = vand.u32 %v279, 2147483648
        %v306 = vor.u32 1.1754944e-38, %v305
        %v307 = vsel %vm304, %v306, %v302
        %v308 = vlaneseq
        %v309 = vshrl.u32 %v308, 7
        %v310 = vperm.slane %v230, 0
        %v311 = vperm.slane %v230, 1
        %vm312 = vcmp.eq.s32.totalorder %v309, %v310
        %vm313 = vcmp.eq.s32.totalorder %v309, %v311
        %v314 = vsel %vm312, %v293, 0.0
        %v315 = vsel %vm313, %v307, 0.0
        %v316 = vld [vmem:[%s220] sm:$0xf]
        %317 = vst [vmem:[#allocation1] ss:$2 sm:$0xff] %v259
        %v318 = vld.sshfl [vmem:[#allocation1] sm:$0xff pattern:$0x75316420]
        %v319 = vld.sshfl [vmem:[#allocation1 + $0x8] sm:$0xff pattern:$0x75316420]
        %322 = vmatpush.xpose.msra.mxu0 0.0
        %323 = vmatpush.xpose.msra.mxu0 0.0
        %324 = vmatpush.xpose.msra.mxu0 0.0
        %325 = vmatpush.xpose.msra.mxu0 0.0
        %326 = vmatpush.xpose.msra.mxu0 0.0
        %327 = vmatpush.xpose.msra.mxu0 0.0
        %328 = vmatpush.xpose.msra.mxu0 0.0
        %329 = vmatpush.xpose.msra.mxu0 0.0
        %330 = vmatpush.xpose.msra.mxu0 0.0
        %331 = vmatpush.xpose.msra.mxu0 0.0
        %332 = vmatpush.xpose.msra.mxu0 0.0
        %333 = vmatpush.xpose.msra.mxu0 0.0
        %334 = vmatpush.xpose.msra.mxu0 0.0
        %335 = vmatpush.xpose.msra.mxu0 0.0
        %336 = vmatpush.xpose.msra.mxu0 0.0
        %v337 = vand.u32 %v314, 4294901760
        %338 = vmatpush.xpose.msra.mxu0 %v337
        %v339 = vand.u32 %v318, 4294901760
        %v340 = vsub.f32 %v318, %v339
        %v341 = vand.u32 %v340, 4294901760
        %v342 = vsub.f32 %v340, %v341
        %v343 = vand.u32 %v342, 4294901760
        %344 = vmatmul.f32.gmra.mxu0 %v343
        %v345 = vpop.f32.mrf.mxu0
        %v346 = vadd.f32 0.0, %v345
        %347 = vdwg.mxu0
        %348 = vmatpush.xpose.msra.mxu0 0.0
        %349 = vmatpush.xpose.msra.mxu0 0.0
        %350 = vmatpush.xpose.msra.mxu0 0.0
        %351 = vmatpush.xpose.msra.mxu0 0.0
        %352 = vmatpush.xpose.msra.mxu0 0.0
        %353 = vmatpush.xpose.msra.mxu0 0.0
        %354 = vmatpush.xpose.msra.mxu0 0.0
        %355 = vmatpush.xpose.msra.mxu0 0.0
        %356 = vmatpush.xpose.msra.mxu0 0.0
        %357 = vmatpush.xpose.msra.mxu0 0.0
        %358 = vmatpush.xpose.msra.mxu0 0.0
        %359 = vmatpush.xpose.msra.mxu0 0.0
        %360 = vmatpush.xpose.msra.mxu0 0.0
        %361 = vmatpush.xpose.msra.mxu0 0.0
        %362 = vmatpush.xpose.msra.mxu0 0.0
        %v363 = vand.u32 %v314, 4294901760
        %v364 = vsub.f32 %v314, %v363
        %v365 = vand.u32 %v364, 4294901760
        %v366 = vsub.f32 %v364, %v365
        %v367 = vand.u32 %v366, 4294901760
        %368 = vmatpush.xpose.msra.mxu0 %v367
        %v369 = vand.u32 %v318, 4294901760
        %370 = vmatmul.f32.gmra.mxu0 %v369
        %v371 = vpop.f32.mrf.mxu0
        %v372 = vadd.f32 %v346, %v371
        %373 = vdwg.mxu0
        %374 = vmatpush.xpose.msra.mxu0 0.0
        %375 = vmatpush.xpose.msra.mxu0 0.0
        %376 = vmatpush.xpose.msra.mxu0 0.0
        %377 = vmatpush.xpose.msra.mxu0 0.0
        %378 = vmatpush.xpose.msra.mxu0 0.0
        %379 = vmatpush.xpose.msra.mxu0 0.0
        %380 = vmatpush.xpose.msra.mxu0 0.0
        %381 = vmatpush.xpose.msra.mxu0 0.0
        %382 = vmatpush.xpose.msra.mxu0 0.0
        %383 = vmatpush.xpose.msra.mxu0 0.0
        %384 = vmatpush.xpose.msra.mxu0 0.0
        %385 = vmatpush.xpose.msra.mxu0 0.0
        %386 = vmatpush.xpose.msra.mxu0 0.0
        %387 = vmatpush.xpose.msra.mxu0 0.0
        %388 = vmatpush.xpose.msra.mxu0 0.0
        %v389 = vand.u32 %v314, 4294901760
        %v390 = vsub.f32 %v314, %v389
        %391 = vmatpush.xpose.msra.mxu0 %v390
        %v392 = vand.u32 %v318, 4294901760
        %v393 = vsub.f32 %v318, %v392
        %394 = vmatmul.f32.gmra.mxu0 %v393
        %v395 = vpop.f32.mrf.mxu0
        %v396 = vadd.f32 %v372, %v395
        %397 = vdwg.mxu0
        %398 = vmatpush.xpose.msra.mxu0 0.0
        %399 = vmatpush.xpose.msra.mxu0 0.0
        %400 = vmatpush.xpose.msra.mxu0 0.0
        %401 = vmatpush.xpose.msra.mxu0 0.0
        %402 = vmatpush.xpose.msra.mxu0 0.0
        %403 = vmatpush.xpose.msra.mxu0 0.0
        %404 = vmatpush.xpose.msra.mxu0 0.0
        %405 = vmatpush.xpose.msra.mxu0 0.0
        %406 = vmatpush.xpose.msra.mxu0 0.0
        %407 = vmatpush.xpose.msra.mxu0 0.0
        %408 = vmatpush.xpose.msra.mxu0 0.0
        %409 = vmatpush.xpose.msra.mxu0 0.0
        %410 = vmatpush.xpose.msra.mxu0 0.0
        %411 = vmatpush.xpose.msra.mxu0 0.0
        %412 = vmatpush.xpose.msra.mxu0 0.0
        %v413 = vand.u32 %v314, 4294901760
        %414 = vmatpush.xpose.msra.mxu0 %v413
        %v415 = vand.u32 %v318, 4294901760
        %v416 = vsub.f32 %v318, %v415
        %v417 = vand.u32 %v416, 4294901760
        %418 = vmatmul.f32.gmra.mxu0 %v417
        %v419 = vpop.f32.mrf.mxu0
        %v420 = vadd.f32 %v396, %v419
        %421 = vdwg.mxu0
        %422 = vmatpush.xpose.msra.mxu0 0.0
        %423 = vmatpush.xpose.msra.mxu0 0.0
        %424 = vmatpush.xpose.msra.mxu0 0.0
        %425 = vmatpush.xpose.msra.mxu0 0.0
        %426 = vmatpush.xpose.msra.mxu0 0.0
        %427 = vmatpush.xpose.msra.mxu0 0.0
        %428 = vmatpush.xpose.msra.mxu0 0.0
        %429 = vmatpush.xpose.msra.mxu0 0.0
        %430 = vmatpush.xpose.msra.mxu0 0.0
        %431 = vmatpush.xpose.msra.mxu0 0.0
        %432 = vmatpush.xpose.msra.mxu0 0.0
        %433 = vmatpush.xpose.msra.mxu0 0.0
        %434 = vmatpush.xpose.msra.mxu0 0.0
        %435 = vmatpush.xpose.msra.mxu0 0.0
        %436 = vmatpush.xpose.msra.mxu0 0.0
        %v437 = vand.u32 %v314, 4294901760
        %v438 = vsub.f32 %v314, %v437
        %v439 = vand.u32 %v438, 4294901760
        %440 = vmatpush.xpose.msra.mxu0 %v439
        %v441 = vand.u32 %v318, 4294901760
        %442 = vmatmul.f32.gmra.mxu0 %v441
        %v443 = vpop.f32.mrf.mxu0
        %v444 = vadd.f32 %v420, %v443
        %445 = vdwg.mxu0
        %446 = vmatpush.xpose.msra.mxu0 0.0
        %447 = vmatpush.xpose.msra.mxu0 0.0
        %448 = vmatpush.xpose.msra.mxu0 0.0
        %449 = vmatpush.xpose.msra.mxu0 0.0
        %450 = vmatpush.xpose.msra.mxu0 0.0
        %451 = vmatpush.xpose.msra.mxu0 0.0
        %452 = vmatpush.xpose.msra.mxu0 0.0
        %453 = vmatpush.xpose.msra.mxu0 0.0
        %454 = vmatpush.xpose.msra.mxu0 0.0
        %455 = vmatpush.xpose.msra.mxu0 0.0
        %456 = vmatpush.xpose.msra.mxu0 0.0
        %457 = vmatpush.xpose.msra.mxu0 0.0
        %458 = vmatpush.xpose.msra.mxu0 0.0
        %459 = vmatpush.xpose.msra.mxu0 0.0
        %460 = vmatpush.xpose.msra.mxu0 0.0
        %v461 = vand.u32 %v314, 4294901760
        %462 = vmatpush.xpose.msra.mxu0 %v461
        %v463 = vand.u32 %v318, 4294901760
        %464 = vmatmul.f32.gmra.mxu0 %v463
        %v465 = vpop.f32.mrf.mxu0
        %v466 = vadd.f32 %v444, %v465
        %467 = vdwg.mxu0
        %468 = vmatpush.xpose.msra.mxu0 0.0
        %469 = vmatpush.xpose.msra.mxu0 0.0
        %470 = vmatpush.xpose.msra.mxu0 0.0
        %471 = vmatpush.xpose.msra.mxu0 0.0
        %472 = vmatpush.xpose.msra.mxu0 0.0
        %473 = vmatpush.xpose.msra.mxu0 0.0
        %474 = vmatpush.xpose.msra.mxu0 0.0
        %475 = vmatpush.xpose.msra.mxu0 0.0
        %476 = vmatpush.xpose.msra.mxu0 0.0
        %477 = vmatpush.xpose.msra.mxu0 0.0
        %478 = vmatpush.xpose.msra.mxu0 0.0
        %479 = vmatpush.xpose.msra.mxu0 0.0
        %480 = vmatpush.xpose.msra.mxu0 0.0
        %481 = vmatpush.xpose.msra.mxu0 0.0
        %482 = vmatpush.xpose.msra.mxu0 0.0
        %v483 = vand.u32 %v315, 4294901760
        %484 = vmatpush.xpose.msra.mxu0 %v483
        %v485 = vand.u32 %v319, 4294901760
        %v486 = vsub.f32 %v319, %v485
        %v487 = vand.u32 %v486, 4294901760
        %v488 = vsub.f32 %v486, %v487
        %v489 = vand.u32 %v488, 4294901760
        %490 = vmatmul.f32.gmra.mxu0 %v489
        %v491 = vpop.f32.mrf.mxu0
        %v492 = vadd.f32 %v466, %v491
        %493 = vdwg.mxu0
        %494 = vmatpush.xpose.msra.mxu0 0.0
        %495 = vmatpush.xpose.msra.mxu0 0.0
        %496 = vmatpush.xpose.msra.mxu0 0.0
        %497 = vmatpush.xpose.msra.mxu0 0.0
        %498 = vmatpush.xpose.msra.mxu0 0.0
        %499 = vmatpush.xpose.msra.mxu0 0.0
        %500 = vmatpush.xpose.msra.mxu0 0.0
        %501 = vmatpush.xpose.msra.mxu0 0.0
        %502 = vmatpush.xpose.msra.mxu0 0.0
        %503 = vmatpush.xpose.msra.mxu0 0.0
        %504 = vmatpush.xpose.msra.mxu0 0.0
        %505 = vmatpush.xpose.msra.mxu0 0.0
        %506 = vmatpush.xpose.msra.mxu0 0.0
        %507 = vmatpush.xpose.msra.mxu0 0.0
        %508 = vmatpush.xpose.msra.mxu0 0.0
        %v509 = vand.u32 %v315, 4294901760
        %v510 = vsub.f32 %v315, %v509
        %v511 = vand.u32 %v510, 4294901760
        %v512 = vsub.f32 %v510, %v511
        %v513 = vand.u32 %v512, 4294901760
        %514 = vmatpush.xpose.msra.mxu0 %v513
        %v515 = vand.u32 %v319, 4294901760
        %516 = vmatmul.f32.gmra.mxu0 %v515
        %v517 = vpop.f32.mrf.mxu0
        %v518 = vadd.f32 %v492, %v517
        %519 = vdwg.mxu0
        %520 = vmatpush.xpose.msra.mxu0 0.0
        %521 = vmatpush.xpose.msra.mxu0 0.0
        %522 = vmatpush.xpose.msra.mxu0 0.0
        %523 = vmatpush.xpose.msra.mxu0 0.0
        %524 = vmatpush.xpose.msra.mxu0 0.0
        %525 = vmatpush.xpose.msra.mxu0 0.0
        %526 = vmatpush.xpose.msra.mxu0 0.0
        %527 = vmatpush.xpose.msra.mxu0 0.0
        %528 = vmatpush.xpose.msra.mxu0 0.0
        %529 = vmatpush.xpose.msra.mxu0 0.0
        %530 = vmatpush.xpose.msra.mxu0 0.0
        %531 = vmatpush.xpose.msra.mxu0 0.0
        %532 = vmatpush.xpose.msra.mxu0 0.0
        %533 = vmatpush.xpose.msra.mxu0 0.0
        %534 = vmatpush.xpose.msra.mxu0 0.0
        %v535 = vand.u32 %v315, 4294901760
        %v536 = vsub.f32 %v315, %v535
        %537 = vmatpush.xpose.msra.mxu0 %v536
        %v538 = vand.u32 %v319, 4294901760
        %v539 = vsub.f32 %v319, %v538
        %540 = vmatmul.f32.gmra.mxu0 %v539
        %v541 = vpop.f32.mrf.mxu0
        %v542 = vadd.f32 %v518, %v541
        %543 = vdwg.mxu0
        %544 = vmatpush.xpose.msra.mxu0 0.0
        %545 = vmatpush.xpose.msra.mxu0 0.0
        %546 = vmatpush.xpose.msra.mxu0 0.0
        %547 = vmatpush.xpose.msra.mxu0 0.0
        %548 = vmatpush.xpose.msra.mxu0 0.0
        %549 = vmatpush.xpose.msra.mxu0 0.0
        %550 = vmatpush.xpose.msra.mxu0 0.0
        %551 = vmatpush.xpose.msra.mxu0 0.0
        %552 = vmatpush.xpose.msra.mxu0 0.0
        %553 = vmatpush.xpose.msra.mxu0 0.0
        %554 = vmatpush.xpose.msra.mxu0 0.0
        %555 = vmatpush.xpose.msra.mxu0 0.0
        %556 = vmatpush.xpose.msra.mxu0 0.0
        %557 = vmatpush.xpose.msra.mxu0 0.0
        %558 = vmatpush.xpose.msra.mxu0 0.0
        %v559 = vand.u32 %v315, 4294901760
        %560 = vmatpush.xpose.msra.mxu0 %v559
        %v561 = vand.u32 %v319, 4294901760
        %v562 = vsub.f32 %v319, %v561
        %v563 = vand.u32 %v562, 4294901760
        %564 = vmatmul.f32.gmra.mxu0 %v563
        %v565 = vpop.f32.mrf.mxu0
        %v566 = vadd.f32 %v542, %v565
        %567 = vdwg.mxu0
        %568 = vmatpush.xpose.msra.mxu0 0.0
        %569 = vmatpush.xpose.msra.mxu0 0.0
        %570 = vmatpush.xpose.msra.mxu0 0.0
        %571 = vmatpush.xpose.msra.mxu0 0.0
        %572 = vmatpush.xpose.msra.mxu0 0.0
        %573 = vmatpush.xpose.msra.mxu0 0.0
        %574 = vmatpush.xpose.msra.mxu0 0.0
        %575 = vmatpush.xpose.msra.mxu0 0.0
        %576 = vmatpush.xpose.msra.mxu0 0.0
        %577 = vmatpush.xpose.msra.mxu0 0.0
        %578 = vmatpush.xpose.msra.mxu0 0.0
        %579 = vmatpush.xpose.msra.mxu0 0.0
        %580 = vmatpush.xpose.msra.mxu0 0.0
        %581 = vmatpush.xpose.msra.mxu0 0.0
        %582 = vmatpush.xpose.msra.mxu0 0.0
        %v583 = vand.u32 %v315, 4294901760
        %v584 = vsub.f32 %v315, %v583
        %v585 = vand.u32 %v584, 4294901760
        %586 = vmatpush.xpose.msra.mxu0 %v585
        %v587 = vand.u32 %v319, 4294901760
        %588 = vmatmul.f32.gmra.mxu0 %v587
        %v589 = vpop.f32.mrf.mxu0
        %v590 = vadd.f32 %v566, %v589
        %591 = vdwg.mxu0
        %592 = vmatpush.xpose.msra.mxu0 0.0
        %593 = vmatpush.xpose.msra.mxu0 0.0
        %594 = vmatpush.xpose.msra.mxu0 0.0
        %595 = vmatpush.xpose.msra.mxu0 0.0
        %596 = vmatpush.xpose.msra.mxu0 0.0
        %597 = vmatpush.xpose.msra.mxu0 0.0
        %598 = vmatpush.xpose.msra.mxu0 0.0
        %599 = vmatpush.xpose.msra.mxu0 0.0
        %600 = vmatpush.xpose.msra.mxu0 0.0
        %601 = vmatpush.xpose.msra.mxu0 0.0
        %602 = vmatpush.xpose.msra.mxu0 0.0
        %603 = vmatpush.xpose.msra.mxu0 0.0
        %604 = vmatpush.xpose.msra.mxu0 0.0
        %605 = vmatpush.xpose.msra.mxu0 0.0
        %606 = vmatpush.xpose.msra.mxu0 0.0
        %v607 = vand.u32 %v315, 4294901760
        %608 = vmatpush.xpose.msra.mxu0 %v607
        %v609 = vand.u32 %v319, 4294901760
        %610 = vmatmul.f32.gmra.mxu0 %v609
        %v611 = vpop.f32.mrf.mxu0
        %v612 = vadd.f32 %v590, %v611
        %613 = vdwg.mxu0
        %v614 = vadd.f32 %v316, %v612
        %vm615 = vcmask 27648
        %616 = vst.msk [vmem:[%s220] sm:$0xf] %vm615, %v614
        %s617 = sand.u32 %s98, 1
        %s618 = scalar_lea.sflag [#allocation4], %s617
        %s619 = sand.u32 %s98, 1
        %s620 = smul.addr %s619, 4
        %s621 = scalar_lea.vmem [#allocation7], %s620
        // Predicated region
        $region41: #{tpu_custom_call.1} parent=27 // pred_check
          %p622 = pneg %p108
        $region42: #{tpu_custom_call.1} parent=27 // pred_check_branch
          %624 = sbr.rel (%p622) target = $region44
        $region43: #{tpu_custom_call.1} parent=27 // pred_region
          %626 = vsyncadd %s618, 0
          %s627 = smul.addr %s26, 4
          %s628 = scalar_lea.hbm %s2, %s627
          %s630 = sshll.u32 %s621, 4
          %s631 = int_to_ptr.vmem [resolvable:$true] %s630
          %s632 = sshll.u32 %s628, 4
          %s633 = int_to_ptr.hbm [resolvable:$true] %s632
          %635 = dma.vmem_to_hbm [thread:$0]  %s631, 64, %s633, %s618
        $region44: #{tpu_custom_call.1} parent=27 // pred_fallthru
          _
      $region28: #{tpu_custom_call.1} parent=5 // pred_fallthru
        _
      %p636 = scmp.le.s32.totalorder 2, %s17
      // Predicated region
      $region45: #{tpu_custom_call.1} parent=5 // pred_check
        %p637 = pneg %p636
      $region46: #{tpu_custom_call.1} parent=5 // pred_check_branch
        %639 = sbr.rel (%p637) target = $region48
      $region47: #{tpu_custom_call.1} parent=5 // pred_region
        %s640 = ssub.s32 %s17, 2
        // Predicated region
        $region49: #{tpu_custom_call.1} parent=47 // pred_check
          %p641 = pneg %p114
        $region50: #{tpu_custom_call.1} parent=47 // pred_check_branch
          %643 = sbr.rel (%p641) target = $region52
        $region51: #{tpu_custom_call.1} parent=47 // pred_region
          %s644 = sand.u32 %s99, 1
          %s645 = scalar_lea.sflag [#allocation4], %s644
          %s646 = sand.u32 %s99, 1
          %s647 = smul.addr %s646, 4
          %s648 = scalar_lea.vmem [#allocation7], %s647
          %650 = dma.done %s645, 64
        $region52: #{tpu_custom_call.1} parent=47 // pred_fallthru
          _
      $region48: #{tpu_custom_call.1} parent=5 // pred_fallthru
        _
    $region6: #{tpu_custom_call.1} parent=1 // loop_footer
      %s21 = sadd.s32 1, %s17
    $region7: #{tpu_custom_call.1} parent=1 // loop_footer_branch
      %16 = sbr.rel target = $region3
    $region8: #{tpu_custom_call.1} parent=1 // loop_exit
      _
    %651 = vsyncpa [#allocation3], 1
    %s652 = scalar_lea.sflag [#allocation3], 1
    %653 = vsyncpa %s652, 1
    %654 = vsyncpa [#allocation6], 1
    %s655 = scalar_lea.sflag [#allocation6], 1
    %656 = vsyncpa %s655, 1
    %657 = vsyncpa [#allocation4], 1
    %s658 = scalar_lea.sflag [#allocation4], 1
    %659 = vsyncpa %s658, 1

</llo_original>
